<compile_context>
chip_gen: v7x
topology: tpu7x:2x2x1
jax: 0.10.0
libtpu: 0.0.40
codegen_flags: <defaults>
</compile_context>

<pallas_src>
import jax
import jax.numpy as jnp
from jax.experimental import pallas as pl
from jax.experimental.pallas import tpu as pltpu

STATE_DIM = 2
HIDDEN_DIM = 256
KPAD = 8          # layer-1 contraction dim zero-padded 2 -> 8 (f32 sublane tile)
L3PAD = 8         # layer-3 output rows padded 1 -> 8 (row 0 is the real one)
INIT_W = 0.003
DEFAULT_TB = 2048  # batch tile (lane axis); multiple of 256


def _round_up(x, m):
    return ((x + m - 1) // m) * m


def _choose_batch_tile(B, tb_max):
    # Multiple of 256 (MXU N tile / lane-dense), never over-padding tiny batches.
    tb = min(tb_max, _round_up(B, 256))
    # v7x megacore: keep >= 2 grid steps when the batch allows it so the "parallel"
    # batch axis can shard across both TensorCores (no effect on 1-TC v5e/v6e).
    if B > 256:
        tb = min(tb, max(256, _round_up(_round_up(B, 256) // 2, 256)))
    return tb


def value_net_kernel(x_ref, w1_ref, b1_ref, w2_ref, b2_ref, w3_ref, b3_ref, o_ref):
    # x_ref : (KPAD, TB)        f32   state^T, rows >= STATE_DIM are zero
    # w1_ref: (H, KPAD)         f32   W1^T, cols >= STATE_DIM are zero
    # b1_ref: (H, 1)            f32
    # w2_ref: (H, H)            bf16  W2^T
    # b2_ref: (H, 1)            f32
    # w3_ref: (L3PAD, H)        f32   row 0 = W3^T, rows 1..7 zero
    # b3_ref: (1, 1)            f32   scalar, lives in SMEM
    # o_ref : (1, TB)           f32   lane-dense output row
    #
    # ---- layer 1: MXU, f32 (K = 8, cost negligible; keeps input precision) ----
    h1 = jnp.dot(w1_ref[...], x_ref[...], preferred_element_type=jnp.float32)
    h1 = jnp.maximum(h1 + b1_ref[...], 0.0)                       # (H, TB) f32
    # ---- layer 2: dominant FLOP -> MXU, bf16 operands, f32 accumulation ----
    h2 = jnp.dot(w2_ref[...], h1.astype(jnp.bfloat16),
                 preferred_element_type=jnp.float32)
    h2 = jnp.maximum(h2 + b2_ref[...], 0.0)                       # (H, TB) f32
    # ---- layer 3: MXU again (M padded to 8); result is already lane-dense ----
    v = jnp.dot(w3_ref[...], h2, preferred_element_type=jnp.float32)  # (L3PAD, TB)
    o_ref[...] = v[0:1, :] + b3_ref[0, 0]


def value_network_forward(state, params, tb_max=DEFAULT_TB):
    """state: (B, STATE_DIM) float32; params: dict with w1,b1,w2,b2,w3,b3 (see init_params)."""
    B, s_dim = state.shape
    assert s_dim == STATE_DIM

    tb = _choose_batch_tile(B, tb_max)
    b_pad = _round_up(B, tb)
    num_tiles = b_pad // tb

    # Transposed, lane-dense operands (wrapper-side layout plumbing only).
    x_t = jnp.pad(state.astype(jnp.float32).T,
                  ((0, KPAD - STATE_DIM), (0, b_pad - B)))                     # (KPAD, b_pad)
    w1_t = jnp.pad(params["w1"].astype(jnp.float32).T,
                   ((0, 0), (0, KPAD - STATE_DIM)))                            # (H, KPAD)
    b1_c = params["b1"].astype(jnp.float32).reshape(HIDDEN_DIM, 1)             # (H, 1)
    w2_t = params["w2"].astype(jnp.bfloat16).T                                 # (H, H) bf16
    b2_c = params["b2"].astype(jnp.float32).reshape(HIDDEN_DIM, 1)             # (H, 1)
    w3_t = jnp.pad(params["w3"].astype(jnp.float32).T,
                   ((0, L3PAD - 1), (0, 0)))                                   # (L3PAD, H)
    b3_s = params["b3"].astype(jnp.float32).reshape(1, 1)                      # (1, 1) -> SMEM

    flops = 2 * b_pad * (KPAD * HIDDEN_DIM + HIDDEN_DIM * HIDDEN_DIM + L3PAD * HIDDEN_DIM)
    bytes_accessed = (x_t.size * 4 + w1_t.size * 4 + b1_c.size * 4 + w2_t.size * 2
                      + b2_c.size * 4 + w3_t.size * 4 + b3_s.size * 4 + b_pad * 4)

    const = lambda shape: pl.BlockSpec(shape, lambda i: (0, 0))   # VMEM-resident weights

    out_row = pl.pallas_call(
        value_net_kernel,
        out_shape=jax.ShapeDtypeStruct((1, b_pad), jnp.float32),
        grid=(num_tiles,),
        in_specs=[
            pl.BlockSpec((KPAD, tb), lambda i: (0, i)),            # state^T: batch-tiled, lane-dense
            const((HIDDEN_DIM, KPAD)),                             # w1^T (padded K)
            const((HIDDEN_DIM, 1)),                                # b1 column
            const((HIDDEN_DIM, HIDDEN_DIM)),                       # w2^T (bf16)
            const((HIDDEN_DIM, 1)),                                # b2 column
            const((L3PAD, HIDDEN_DIM)),                            # w3^T (padded M)
            pl.BlockSpec(memory_space=pltpu.MemorySpace.SMEM),     # b3 scalar in SMEM
        ],
        out_specs=pl.BlockSpec((1, tb), lambda i: (0, i)),         # lane-dense output row
        compiler_params=pltpu.CompilerParams(
            dimension_semantics=("parallel",),                     # v7x: shard batch over 2 TCs
            vmem_limit_bytes=32 * 1024 * 1024),                    # safe on v5e's 16 MiB default
        cost_estimate=pl.CostEstimate(flops=flops, transcendentals=0,
                                      bytes_accessed=bytes_accessed),
    )(x_t, w1_t, b1_c, w2_t, b2_c, w3_t, b3_s)

    # (1, b_pad) -> (b_pad, 1) is a data-order-preserving reshape; slice off padded rows.
    return out_row.reshape(b_pad, 1)[:B]


def init_params(key):
    """Deterministic init mirroring PyTorch defaults:
       linear1/linear2: U(-1/sqrt(fan_in), 1/sqrt(fan_in)) for weight and bias,
       linear3: U(-init_w, init_w) for weight and bias.
       Weights stored as (in_features, out_features); biases as (1, out_features)."""
    k1, k2, k3, k4, k5, k6 = jax.random.split(key, 6)
    bound1 = 1.0 / jnp.sqrt(jnp.float32(STATE_DIM))
    bound2 = 1.0 / jnp.sqrt(jnp.float32(HIDDEN_DIM))
    return {
        "w1": jax.random.uniform(k1, (STATE_DIM, HIDDEN_DIM), jnp.float32, -bound1, bound1),
        "b1": jax.random.uniform(k2, (1, HIDDEN_DIM), jnp.float32, -bound1, bound1),
        "w2": jax.random.uniform(k3, (HIDDEN_DIM, HIDDEN_DIM), jnp.float32, -bound2, bound2),
        "b2": jax.random.uniform(k4, (1, HIDDEN_DIM), jnp.float32, -bound2, bound2),
        "w3": jax.random.uniform(k5, (HIDDEN_DIM, 1), jnp.float32, -INIT_W, INIT_W),
        "b3": jax.random.uniform(k6, (1, 1), jnp.float32, -INIT_W, INIT_W),
    }


def reference_forward(state, params):
    h1 = jnp.maximum(state @ params["w1"] + params["b1"], 0.0)
    h2 = jnp.maximum(h1 @ params["w2"] + params["b2"], 0.0)
    return h2 @ params["w3"] + params["b3"]


if __name__ == "__main__":
    key = jax.random.PRNGKey(0)
    pkey, xkey = jax.random.split(key)
    params = init_params(pkey)

    # B=12 exercises the single-tile pad/slice path; B=384 exercises a 2-step grid.
    for B in (12, 384):
        state = jax.random.normal(jax.random.fold_in(xkey, B), (B, STATE_DIM), jnp.float32)
        out = jax.block_until_ready(value_network_forward(state, params))
        ref = reference_forward(state, params)
        assert out.shape == (B, 1), out.shape
        # layer 2 uses bf16 operands (f32 accumulation) -> bf16-level tolerance
        max_err = float(jnp.max(jnp.abs(out - ref)))
        assert jnp.allclose(out, ref, atol=3e-3, rtol=2e-2), (B, max_err)

    print("KERNEL_OK")
</pallas_src>

<mosaic_0001>
module attributes {stable_mosaic.version = 11 : i64} {
  func.func @value_net_kernel(%arg0: i32, %arg1: memref<8x256xf32, #tpu.memory_space<vmem>>, %arg2: memref<256x8xf32, #tpu.memory_space<vmem>>, %arg3: memref<256x1xf32, #tpu.memory_space<vmem>>, %arg4: memref<256x256xbf16, #tpu.memory_space<vmem>>, %arg5: memref<256x1xf32, #tpu.memory_space<vmem>>, %arg6: memref<8x256xf32, #tpu.memory_space<vmem>>, %arg7: memref<1x1xf32, #tpu.memory_space<smem>>, %arg8: memref<1x256xf32, #tpu.memory_space<vmem>>) attributes {dimension_semantics = [#tpu.dimension_semantics<parallel>], iteration_bounds = array<i64: 1>, scalar_prefetch = 0 : i64, scratch_operands = 0 : i64, tpu.core_type = #tpu.core_type<tc>, window_params = [{transform_indices = @transform_0, window_bounds = array<i64: 8, 256>}, {pipeline_mode = #tpu.pipeline_mode<synchronous>, transform_indices = @transform_1, window_bounds = array<i64: 256, 8>}, {pipeline_mode = #tpu.pipeline_mode<synchronous>, transform_indices = @transform_2, window_bounds = array<i64: 256, 1>}, {pipeline_mode = #tpu.pipeline_mode<synchronous>, transform_indices = @transform_3, window_bounds = array<i64: 256, 256>}, {pipeline_mode = #tpu.pipeline_mode<synchronous>, transform_indices = @transform_4, window_bounds = array<i64: 256, 1>}, {pipeline_mode = #tpu.pipeline_mode<synchronous>, transform_indices = @transform_5, window_bounds = array<i64: 8, 256>}, {transform_indices = @transform_6, window_bounds = array<i64: 1, 1>}, {transform_indices = @transform_7, window_bounds = array<i64: 1, 256>}]} {
    %c0 = arith.constant 0 : index
    %c0_0 = arith.constant 0 : index
    %0 = vector.load %arg2[%c0, %c0_0] : memref<256x8xf32, #tpu.memory_space<vmem>>, vector<256x8xf32>
    %c0_1 = arith.constant 0 : index
    %c0_2 = arith.constant 0 : index
    %1 = vector.load %arg1[%c0_1, %c0_2] : memref<8x256xf32, #tpu.memory_space<vmem>>, vector<8x256xf32>
    %cst = arith.constant dense<0.000000e+00> : vector<256x256xf32>
    %2 = tpu.matmul %0, %1, %cst {dimension_numbers = #tpu.dot_dimension_numbers<[1], [0], [0], [1], [0, 0, 1, 1], [], []>} : vector<256x8xf32>, vector<8x256xf32>, vector<256x256xf32> -> vector<256x256xf32>
    %c0_3 = arith.constant 0 : index
    %c0_4 = arith.constant 0 : index
    %3 = vector.load %arg3[%c0_3, %c0_4] : memref<256x1xf32, #tpu.memory_space<vmem>>, vector<256x1xf32>
    %4 = vector.broadcast %3 : vector<256x1xf32> to vector<256x256xf32>
    %5 = arith.addf %2, %4 : vector<256x256xf32>
    %cst_5 = arith.constant 0.000000e+00 : f32
    %6 = vector.broadcast %cst_5 : f32 to vector<256x256xf32>
    %7 = arith.maximumf %5, %6 : vector<256x256xf32>
    %c0_6 = arith.constant 0 : index
    %c0_7 = arith.constant 0 : index
    %8 = vector.load %arg4[%c0_6, %c0_7] : memref<256x256xbf16, #tpu.memory_space<vmem>>, vector<256x256xbf16>
    %9 = arith.truncf %7 : vector<256x256xf32> to vector<256x256xbf16>
    %cst_8 = arith.constant dense<0.000000e+00> : vector<256x256xf32>
    %10 = tpu.matmul %8, %9, %cst_8 {dimension_numbers = #tpu.dot_dimension_numbers<[1], [0], [0], [1], [0, 0, 1, 1], [], []>} : vector<256x256xbf16>, vector<256x256xbf16>, vector<256x256xf32> -> vector<256x256xf32>
    %c0_9 = arith.constant 0 : index
    %c0_10 = arith.constant 0 : index
    %11 = vector.load %arg5[%c0_9, %c0_10] : memref<256x1xf32, #tpu.memory_space<vmem>>, vector<256x1xf32>
    %12 = vector.broadcast %11 : vector<256x1xf32> to vector<256x256xf32>
    %13 = arith.addf %10, %12 : vector<256x256xf32>
    %cst_11 = arith.constant 0.000000e+00 : f32
    %14 = vector.broadcast %cst_11 : f32 to vector<256x256xf32>
    %15 = arith.maximumf %13, %14 : vector<256x256xf32>
    %c0_12 = arith.constant 0 : index
    %c0_13 = arith.constant 0 : index
    %16 = vector.load %arg6[%c0_12, %c0_13] : memref<8x256xf32, #tpu.memory_space<vmem>>, vector<8x256xf32>
    %cst_14 = arith.constant dense<0.000000e+00> : vector<8x256xf32>
    %17 = tpu.matmul %16, %15, %cst_14 {dimension_numbers = #tpu.dot_dimension_numbers<[1], [0], [0], [1], [0, 0, 1, 1], [], []>} : vector<8x256xf32>, vector<256x256xf32>, vector<8x256xf32> -> vector<8x256xf32>
    %18 = vector.extract_strided_slice %17 {offsets = [0, 0], sizes = [1, 256], strides = [1, 1]} : vector<8x256xf32> to vector<1x256xf32>
    %c0_15 = arith.constant 0 : index
    %c0_16 = arith.constant 0 : index
    %19 = memref.load %arg7[%c0_15, %c0_16] : memref<1x1xf32, #tpu.memory_space<smem>>
    %20 = vector.broadcast %19 : f32 to vector<1x256xf32>
    %21 = arith.addf %18, %20 : vector<1x256xf32>
    %c0_17 = arith.constant 0 : index
    %c0_18 = arith.constant 0 : index
    %22 = vector.load %arg8[%c0_17, %c0_18] : memref<1x256xf32, #tpu.memory_space<vmem>>, vector<1x256xf32>
    tpu.vector_store %arg8[%c0_17, %c0_18], %21 {strides = array<i32>} : memref<1x256xf32, #tpu.memory_space<vmem>>, vector<1x256xf32>,
    return
  }
  func.func @transform_0(%arg0: i32) -> (i32, i32) {
    %c0_i32 = arith.constant 0 : i32
    %c0_i32_0 = arith.constant 0 : i32
    return %c0_i32, %arg0 : i32, i32
  }
  func.func @transform_1(%arg0: i32) -> (i32, i32) {
    %c0_i32 = arith.constant 0 : i32
    %c0_i32_0 = arith.constant 0 : i32
    %c0_i32_1 = arith.constant 0 : i32
    return %c0_i32, %c0_i32_0 : i32, i32
  }
  func.func @transform_2(%arg0: i32) -> (i32, i32) {
    %c0_i32 = arith.constant 0 : i32
    %c0_i32_0 = arith.constant 0 : i32
    %c0_i32_1 = arith.constant 0 : i32
    return %c0_i32, %c0_i32_0 : i32, i32
  }
  func.func @transform_3(%arg0: i32) -> (i32, i32) {
    %c0_i32 = arith.constant 0 : i32
    %c0_i32_0 = arith.constant 0 : i32
    %c0_i32_1 = arith.constant 0 : i32
    return %c0_i32, %c0_i32_0 : i32, i32
  }
  func.func @transform_4(%arg0: i32) -> (i32, i32) {
    %c0_i32 = arith.constant 0 : i32
    %c0_i32_0 = arith.constant 0 : i32
    %c0_i32_1 = arith.constant 0 : i32
    return %c0_i32, %c0_i32_0 : i32, i32
  }
  func.func @transform_5(%arg0: i32) -> (i32, i32) {
    %c0_i32 = arith.constant 0 : i32
    %c0_i32_0 = arith.constant 0 : i32
    %c0_i32_1 = arith.constant 0 : i32
    return %c0_i32, %c0_i32_0 : i32, i32
  }
  func.func @transform_6(%arg0: i32) -> (i32, i32) {
    %c0_i32 = arith.constant 0 : i32
    %c0_i32_0 = arith.constant 0 : i32
    %c0_i32_1 = arith.constant 0 : i32
    return %c0_i32, %c0_i32_0 : i32, i32
  }
  func.func @transform_7(%arg0: i32) -> (i32, i32) {
    %c0_i32 = arith.constant 0 : i32
    %c0_i32_0 = arith.constant 0 : i32
    return %c0_i32, %arg0 : i32, i32
  }
}

</mosaic_0001>

<llo_original>
// kernel: tpu_custom_call.1
$region0: #{tpu_custom_call.1}
  #allocation0 [shape = 'u32[]', space=smem, size = 0x4, offset = 0x4, fixed_abs, tag = 'smem constant byte address 0x4 - core index']
  #allocation1 [shape = 'u32[144,128]{1,0:T(1,128)}', space=vmem, size = 0x12000, scoped, tag = 'internal scratch']
  #allocation2 [shape = 'f32[1,1]{1,0:T(1,128)S(6)}', space=smem, size = 0x200, scoped, tag = 'scoped memory for tpu_custom_call.1']
  %s0 = inlined_call_operand.vmem [shape: f32[8,256], index: 0, kind: input, shape index: {}]
  %s1 = inlined_call_operand.vmem [shape: f32[256,8], index: 1, kind: input, shape index: {}]
  %s2 = inlined_call_operand.vmem [shape: f32[256,1], index: 2, kind: input, shape index: {}]
  %s3 = inlined_call_operand.vmem [shape: bf16[256,256], index: 3, kind: input, shape index: {}]
  %s4 = inlined_call_operand.vmem [shape: f32[256,1], index: 4, kind: input, shape index: {}]
  %s5 = inlined_call_operand.vmem [shape: f32[8,256], index: 5, kind: input, shape index: {}]
  %s6 = inlined_call_operand.<no memory space> [shape: f32[1,1], index: 6, kind: input, shape index: {}]
  %s7 = inlined_call_operand.hbm [shape: f32[1,256], index: 7, kind: output, shape index: {}]
  %s8 = sld [smem:[#allocation0]]
  $region38: #{tpu_custom_call.1} parent=0
    _
  %s10 = ssub.s32 1, %s8
  %s11 = scalar_select 0, %s10, %s8
  %12 = sst [smem:[#allocation2]] %s6
  $region1: #{tpu_custom_call.1} parent=0
    #allocation3 [shape = 'u8[1024]{0}', space=vmem, size = 0x400, scoped, tag = 'output window, operand 0, single buffered']
    #allocation4 [shape = 's32[1]{0}', space=sflag, size = 0x4, scoped, tag = 'scoped memory for tpu_custom_call.1']
    %13 = vsyncpa [#allocation4], 0
    // Predicated region
    $region2: #{tpu_custom_call.1} parent=1 // pred_check
      _
    $region3: #{tpu_custom_call.1} parent=1 // pred_check_branch
      %15 = sbr.rel (0) target = $region5
    $region4: #{tpu_custom_call.1} parent=1 // pred_region
      _
    $region5: #{tpu_custom_call.1} parent=1 // pred_fallthru
      _
    // Predicated region
    $region6: #{tpu_custom_call.1} parent=1 // pred_check
      _
    $region7: #{tpu_custom_call.1} parent=1 // pred_check_branch
      %17 = sbr.rel (0) target = $region9
    $region8: #{tpu_custom_call.1} parent=1 // pred_region
      _
    $region9: #{tpu_custom_call.1} parent=1 // pred_fallthru
      _
    // Predicated region
    $region10: #{tpu_custom_call.1} parent=1 // pred_check
      _
    $region11: #{tpu_custom_call.1} parent=1 // pred_check_branch
      %19 = sbr.rel (0) target = $region13
    $region12: #{tpu_custom_call.1} parent=1 // pred_region
      _
    $region13: #{tpu_custom_call.1} parent=1 // pred_fallthru
      _
    // Predicated region
    $region14: #{tpu_custom_call.1} parent=1 // pred_check
      _
    $region15: #{tpu_custom_call.1} parent=1 // pred_check_branch
      %21 = sbr.rel (0) target = $region17
    $region16: #{tpu_custom_call.1} parent=1 // pred_region
      _
    $region17: #{tpu_custom_call.1} parent=1 // pred_fallthru
      _
    // Predicated region
    $region18: #{tpu_custom_call.1} parent=1 // pred_check
      _
    $region19: #{tpu_custom_call.1} parent=1 // pred_check_branch
      %23 = sbr.rel (0) target = $region21
    $region20: #{tpu_custom_call.1} parent=1 // pred_region
      _
    $region21: #{tpu_custom_call.1} parent=1 // pred_fallthru
      _
    // Predicated region
    $region22: #{tpu_custom_call.1} parent=1 // pred_check
      _
    $region23: #{tpu_custom_call.1} parent=1 // pred_check_branch
      %25 = sbr.rel (0) target = $region25
    $region24: #{tpu_custom_call.1} parent=1 // pred_region
      _
    $region25: #{tpu_custom_call.1} parent=1 // pred_fallthru
      _
    // Predicated region
    $region26: #{tpu_custom_call.1} parent=1 // pred_check
      _
    $region27: #{tpu_custom_call.1} parent=1 // pred_check_branch
      %27 = sbr.rel (0) target = $region29
    $region28: #{tpu_custom_call.1} parent=1 // pred_region
      _
    $region29: #{tpu_custom_call.1} parent=1 // pred_fallthru
      _
    %v28 = vld [vmem:[%s1] sm:$0xff]
    %v29 = vld [vmem:[%s1 + $0x8] sm:$0xff]
    %v30 = vld [vmem:[%s1 + $0x10] sm:$0xff]
    %v31 = vld [vmem:[%s1 + $0x18] sm:$0xff]
    %v32 = vld [vmem:[%s1 + $0x20] sm:$0xff]
    %v33 = vld [vmem:[%s1 + $0x28] sm:$0xff]
    %v34 = vld [vmem:[%s1 + $0x30] sm:$0xff]
    %v35 = vld [vmem:[%s1 + $0x38] sm:$0xff]
    %v36 = vld [vmem:[%s1 + $0x40] sm:$0xff]
    %v37 = vld [vmem:[%s1 + $0x48] sm:$0xff]
    %v38 = vld [vmem:[%s1 + $0x50] sm:$0xff]
    %v39 = vld [vmem:[%s1 + $0x58] sm:$0xff]
    %v40 = vld [vmem:[%s1 + $0x60] sm:$0xff]
    %v41 = vld [vmem:[%s1 + $0x68] sm:$0xff]
    %v42 = vld [vmem:[%s1 + $0x70] sm:$0xff]
    %v43 = vld [vmem:[%s1 + $0x78] sm:$0xff]
    %v44 = vld [vmem:[%s1 + $0x80] sm:$0xff]
    %v45 = vld [vmem:[%s1 + $0x88] sm:$0xff]
    %v46 = vld [vmem:[%s1 + $0x90] sm:$0xff]
    %v47 = vld [vmem:[%s1 + $0x98] sm:$0xff]
    %v48 = vld [vmem:[%s1 + $0xa0] sm:$0xff]
    %v49 = vld [vmem:[%s1 + $0xa8] sm:$0xff]
    %v50 = vld [vmem:[%s1 + $0xb0] sm:$0xff]
    %v51 = vld [vmem:[%s1 + $0xb8] sm:$0xff]
    %v52 = vld [vmem:[%s1 + $0xc0] sm:$0xff]
    %v53 = vld [vmem:[%s1 + $0xc8] sm:$0xff]
    %v54 = vld [vmem:[%s1 + $0xd0] sm:$0xff]
    %v55 = vld [vmem:[%s1 + $0xd8] sm:$0xff]
    %v56 = vld [vmem:[%s1 + $0xe0] sm:$0xff]
    %v57 = vld [vmem:[%s1 + $0xe8] sm:$0xff]
    %v58 = vld [vmem:[%s1 + $0xf0] sm:$0xff]
    %v59 = vld [vmem:[%s1 + $0xf8] sm:$0xff]
    %v60 = vld [vmem:[%s0] sm:$0xff]
    %v61 = vld [vmem:[%s0 + $0x8] sm:$0xff]
    %v62 = vld [vmem:[%s2] sm:$0xff]
    %v63 = vld [vmem:[%s2 + $0x8] sm:$0xff]
    %v64 = vld [vmem:[%s2 + $0x10] sm:$0xff]
    %v65 = vld [vmem:[%s2 + $0x18] sm:$0xff]
    %v66 = vld [vmem:[%s2 + $0x20] sm:$0xff]
    %v67 = vld [vmem:[%s2 + $0x28] sm:$0xff]
    %v68 = vld [vmem:[%s2 + $0x30] sm:$0xff]
    %v69 = vld [vmem:[%s2 + $0x38] sm:$0xff]
    %v70 = vld [vmem:[%s2 + $0x40] sm:$0xff]
    %v71 = vld [vmem:[%s2 + $0x48] sm:$0xff]
    %v72 = vld [vmem:[%s2 + $0x50] sm:$0xff]
    %v73 = vld [vmem:[%s2 + $0x58] sm:$0xff]
    %v74 = vld [vmem:[%s2 + $0x60] sm:$0xff]
    %v75 = vld [vmem:[%s2 + $0x68] sm:$0xff]
    %v76 = vld [vmem:[%s2 + $0x70] sm:$0xff]
    %v77 = vld [vmem:[%s2 + $0x78] sm:$0xff]
    %v78 = vld [vmem:[%s2 + $0x80] sm:$0xff]
    %v79 = vld [vmem:[%s2 + $0x88] sm:$0xff]
    %v80 = vld [vmem:[%s2 + $0x90] sm:$0xff]
    %v81 = vld [vmem:[%s2 + $0x98] sm:$0xff]
    %v82 = vld [vmem:[%s2 + $0xa0] sm:$0xff]
    %v83 = vld [vmem:[%s2 + $0xa8] sm:$0xff]
    %v84 = vld [vmem:[%s2 + $0xb0] sm:$0xff]
    %v85 = vld [vmem:[%s2 + $0xb8] sm:$0xff]
    %v86 = vld [vmem:[%s2 + $0xc0] sm:$0xff]
    %v87 = vld [vmem:[%s2 + $0xc8] sm:$0xff]
    %v88 = vld [vmem:[%s2 + $0xd0] sm:$0xff]
    %v89 = vld [vmem:[%s2 + $0xd8] sm:$0xff]
    %v90 = vld [vmem:[%s2 + $0xe0] sm:$0xff]
    %v91 = vld [vmem:[%s2 + $0xe8] sm:$0xff]
    %v92 = vld [vmem:[%s2 + $0xf0] sm:$0xff]
    %v93 = vld [vmem:[%s2 + $0xf8] sm:$0xff]
    %95 = vset.pattern.permute.xlu0 0
    %96 = vperm.xlu0 %95, %v62
    %v97 = vpop.permute.xlu0 %96
    %100 = vset.pattern.permute.xlu0 0
    %101 = vperm.xlu0 %100, %v63
    %v102 = vpop.permute.xlu0 %101
    %105 = vset.pattern.permute.xlu0 0
    %106 = vperm.xlu0 %105, %v64
    %v107 = vpop.permute.xlu0 %106
    %110 = vset.pattern.permute.xlu0 0
    %111 = vperm.xlu0 %110, %v65
    %v112 = vpop.permute.xlu0 %111
    %115 = vset.pattern.permute.xlu0 0
    %116 = vperm.xlu0 %115, %v66
    %v117 = vpop.permute.xlu0 %116
    %120 = vset.pattern.permute.xlu0 0
    %121 = vperm.xlu0 %120, %v67
    %v122 = vpop.permute.xlu0 %121
    %125 = vset.pattern.permute.xlu0 0
    %126 = vperm.xlu0 %125, %v68
    %v127 = vpop.permute.xlu0 %126
    %130 = vset.pattern.permute.xlu0 0
    %131 = vperm.xlu0 %130, %v69
    %v132 = vpop.permute.xlu0 %131
    %135 = vset.pattern.permute.xlu0 0
    %136 = vperm.xlu0 %135, %v70
    %v137 = vpop.permute.xlu0 %136
    %140 = vset.pattern.permute.xlu0 0
    %141 = vperm.xlu0 %140, %v71
    %v142 = vpop.permute.xlu0 %141
    %145 = vset.pattern.permute.xlu0 0
    %146 = vperm.xlu0 %145, %v72
    %v147 = vpop.permute.xlu0 %146
    %150 = vset.pattern.permute.xlu0 0
    %151 = vperm.xlu0 %150, %v73
    %v152 = vpop.permute.xlu0 %151
    %155 = vset.pattern.permute.xlu0 0
    %156 = vperm.xlu0 %155, %v74
    %v157 = vpop.permute.xlu0 %156
    %160 = vset.pattern.permute.xlu0 0
    %161 = vperm.xlu0 %160, %v75
    %v162 = vpop.permute.xlu0 %161
    %165 = vset.pattern.permute.xlu0 0
    %166 = vperm.xlu0 %165, %v76
    %v167 = vpop.permute.xlu0 %166
    %170 = vset.pattern.permute.xlu0 0
    %171 = vperm.xlu0 %170, %v77
    %v172 = vpop.permute.xlu0 %171
    %175 = vset.pattern.permute.xlu0 0
    %176 = vperm.xlu0 %175, %v78
    %v177 = vpop.permute.xlu0 %176
    %180 = vset.pattern.permute.xlu0 0
    %181 = vperm.xlu0 %180, %v79
    %v182 = vpop.permute.xlu0 %181
    %185 = vset.pattern.permute.xlu0 0
    %186 = vperm.xlu0 %185, %v80
    %v187 = vpop.permute.xlu0 %186
    %190 = vset.pattern.permute.xlu0 0
    %191 = vperm.xlu0 %190, %v81
    %v192 = vpop.permute.xlu0 %191
    %195 = vset.pattern.permute.xlu0 0
    %196 = vperm.xlu0 %195, %v82
    %v197 = vpop.permute.xlu0 %196
    %200 = vset.pattern.permute.xlu0 0
    %201 = vperm.xlu0 %200, %v83
    %v202 = vpop.permute.xlu0 %201
    %205 = vset.pattern.permute.xlu0 0
    %206 = vperm.xlu0 %205, %v84
    %v207 = vpop.permute.xlu0 %206
    %210 = vset.pattern.permute.xlu0 0
    %211 = vperm.xlu0 %210, %v85
    %v212 = vpop.permute.xlu0 %211
    %215 = vset.pattern.permute.xlu0 0
    %216 = vperm.xlu0 %215, %v86
    %v217 = vpop.permute.xlu0 %216
    %220 = vset.pattern.permute.xlu0 0
    %221 = vperm.xlu0 %220, %v87
    %v222 = vpop.permute.xlu0 %221
    %225 = vset.pattern.permute.xlu0 0
    %226 = vperm.xlu0 %225, %v88
    %v227 = vpop.permute.xlu0 %226
    %230 = vset.pattern.permute.xlu0 0
    %231 = vperm.xlu0 %230, %v89
    %v232 = vpop.permute.xlu0 %231
    %235 = vset.pattern.permute.xlu0 0
    %236 = vperm.xlu0 %235, %v90
    %v237 = vpop.permute.xlu0 %236
    %240 = vset.pattern.permute.xlu0 0
    %241 = vperm.xlu0 %240, %v91
    %v242 = vpop.permute.xlu0 %241
    %245 = vset.pattern.permute.xlu0 0
    %246 = vperm.xlu0 %245, %v92
    %v247 = vpop.permute.xlu0 %246
    %250 = vset.pattern.permute.xlu0 0
    %251 = vperm.xlu0 %250, %v93
    %v252 = vpop.permute.xlu0 %251
    %vm254 = vcmask 64512
    %v256 = vsel %vm254, %v28, 0
    %v259 = vsel %vm254, %v29, 0
    %v262 = vsel %vm254, %v30, 0
    %v265 = vsel %vm254, %v31, 0
    %v268 = vsel %vm254, %v32, 0
    %v271 = vsel %vm254, %v33, 0
    %v274 = vsel %vm254, %v34, 0
    %v277 = vsel %vm254, %v35, 0
    %v280 = vsel %vm254, %v36, 0
    %v283 = vsel %vm254, %v37, 0
    %v286 = vsel %vm254, %v38, 0
    %v289 = vsel %vm254, %v39, 0
    %v292 = vsel %vm254, %v40, 0
    %v295 = vsel %vm254, %v41, 0
    %v298 = vsel %vm254, %v42, 0
    %v301 = vsel %vm254, %v43, 0
    %v304 = vsel %vm254, %v44, 0
    %v307 = vsel %vm254, %v45, 0
    %v310 = vsel %vm254, %v46, 0
    %v313 = vsel %vm254, %v47, 0
    %v316 = vsel %vm254, %v48, 0
    %v319 = vsel %vm254, %v49, 0
    %v322 = vsel %vm254, %v50, 0
    %v325 = vsel %vm254, %v51, 0
    %v328 = vsel %vm254, %v52, 0
    %v331 = vsel %vm254, %v53, 0
    %v334 = vsel %vm254, %v54, 0
    %v337 = vsel %vm254, %v55, 0
    %v340 = vsel %vm254, %v56, 0
    %v343 = vsel %vm254, %v57, 0
    %v346 = vsel %vm254, %v58, 0
    %v349 = vsel %vm254, %v59, 0
    %351 = vmatprep.subr.mxu0 %v61
    %352 = vmatpush1.msra.mxu0 %v60
    %353 = vmatprep.subr.mxu0 0.0
    %354 = vmatpush1.msra.mxu0 0.0
    %355 = vmatprep.subr.mxu0 0.0
    %356 = vmatpush1.msra.mxu0 0.0
    %357 = vmatprep.subr.mxu0 0.0
    %358 = vmatpush1.msra.mxu0 0.0
    %359 = vmatprep.subr.mxu0 0.0
    %360 = vmatpush1.msra.mxu0 0.0
    %361 = vmatprep.subr.mxu0 0.0
    %362 = vmatpush1.msra.mxu0 0.0
    %363 = vmatprep.subr.mxu0 0.0
    %364 = vmatpush1.msra.mxu0 0.0
    %365 = vmatprep.subr.mxu0 0.0
    %366 = vmatpush1.msra.mxu0 0.0
    %367 = vmatprep.subr.mxu0 0.0
    %368 = vmatpush1.msra.mxu0 0.0
    %369 = vmatprep.subr.mxu0 0.0
    %370 = vmatpush1.msra.mxu0 0.0
    %371 = vmatprep.subr.mxu0 0.0
    %372 = vmatpush1.msra.mxu0 0.0
    %373 = vmatprep.subr.mxu0 0.0
    %374 = vmatpush1.msra.mxu0 0.0
    %375 = vmatprep.subr.mxu0 0.0
    %376 = vmatpush1.msra.mxu0 0.0
    %377 = vmatprep.subr.mxu0 0.0
    %378 = vmatpush1.msra.mxu0 0.0
    %379 = vmatprep.subr.mxu0 0.0
    %380 = vmatpush1.msra.mxu0 0.0
    %381 = vmatprep.subr.mxu0 0.0
    %382 = vmatpush1.msra.mxu0 0.0
    %383 = vmatprep.subr.mxu0 0.0
    %384 = vmatpush1.msra.mxu0 0.0
    %385 = vmatprep.subr.mxu0 0.0
    %386 = vmatpush1.msra.mxu0 0.0
    %387 = vmatprep.subr.mxu0 0.0
    %388 = vmatpush1.msra.mxu0 0.0
    %389 = vmatprep.subr.mxu0 0.0
    %390 = vmatpush1.msra.mxu0 0.0
    %391 = vmatprep.subr.mxu0 0.0
    %392 = vmatpush1.msra.mxu0 0.0
    %393 = vmatprep.subr.mxu0 0.0
    %394 = vmatpush1.msra.mxu0 0.0
    %395 = vmatprep.subr.mxu0 0.0
    %396 = vmatpush1.msra.mxu0 0.0
    %397 = vmatprep.subr.mxu0 0.0
    %398 = vmatpush1.msra.mxu0 0.0
    %399 = vmatprep.subr.mxu0 0.0
    %400 = vmatpush1.msra.mxu0 0.0
    %401 = vmatprep.subr.mxu0 0.0
    %402 = vmatpush1.msra.mxu0 0.0
    %403 = vmatprep.subr.mxu0 0.0
    %404 = vmatpush1.msra.mxu0 0.0
    %405 = vmatprep.subr.mxu0 0.0
    %406 = vmatpush1.msra.mxu0 0.0
    %407 = vmatprep.subr.mxu0 0.0
    %408 = vmatpush1.msra.mxu0 0.0
    %409 = vmatprep.subr.mxu0 0.0
    %410 = vmatpush1.msra.mxu0 0.0
    %411 = vmatprep.subr.mxu0 0.0
    %412 = vmatpush1.msra.mxu0 0.0
    %413 = vmatprep.subr.mxu0 0.0
    %414 = vmatpush1.msra.mxu0 0.0
    %415 = vmatprep.mubr.f32.mxu0 0.0
    %416 = vmatmul.mubr.f32.gmra.mrb[0].mxu0 %v256
    %v417 = vpop.f32.mrb[0].mxu0
    %v418 = vadd.f32 %v97, %v417
    %v419 = vpop.f32.mrb[0].mxu0
    %v420 = vadd.f32 %v97, %v419
    %421 = vmatprep.mubr.f32.mxu0 0.0
    %422 = vmatmul.mubr.f32.gmra.mrb[0].mxu0 %v259
    %v423 = vpop.f32.mrb[0].mxu0
    %v424 = vadd.f32 %v102, %v423
    %v425 = vpop.f32.mrb[0].mxu0
    %v426 = vadd.f32 %v102, %v425
    %427 = vmatprep.mubr.f32.mxu0 0.0
    %428 = vmatmul.mubr.f32.gmra.mrb[0].mxu0 %v262
    %v429 = vpop.f32.mrb[0].mxu0
    %v430 = vadd.f32 %v107, %v429
    %v431 = vpop.f32.mrb[0].mxu0
    %v432 = vadd.f32 %v107, %v431
    %433 = vmatprep.mubr.f32.mxu0 0.0
    %434 = vmatmul.mubr.f32.gmra.mrb[0].mxu0 %v265
    %v435 = vpop.f32.mrb[0].mxu0
    %v436 = vadd.f32 %v112, %v435
    %v437 = vpop.f32.mrb[0].mxu0
    %v438 = vadd.f32 %v112, %v437
    %439 = vmatprep.mubr.f32.mxu0 0.0
    %440 = vmatmul.mubr.f32.gmra.mrb[0].mxu0 %v268
    %v441 = vpop.f32.mrb[0].mxu0
    %v442 = vadd.f32 %v117, %v441
    %v443 = vpop.f32.mrb[0].mxu0
    %v444 = vadd.f32 %v117, %v443
    %445 = vmatprep.mubr.f32.mxu0 0.0
    %446 = vmatmul.mubr.f32.gmra.mrb[0].mxu0 %v271
    %v447 = vpop.f32.mrb[0].mxu0
    %v448 = vadd.f32 %v122, %v447
    %v449 = vpop.f32.mrb[0].mxu0
    %v450 = vadd.f32 %v122, %v449
    %451 = vmatprep.mubr.f32.mxu0 0.0
    %452 = vmatmul.mubr.f32.gmra.mrb[0].mxu0 %v274
    %v453 = vpop.f32.mrb[0].mxu0
    %v454 = vadd.f32 %v127, %v453
    %v455 = vpop.f32.mrb[0].mxu0
    %v456 = vadd.f32 %v127, %v455
    %457 = vmatprep.mubr.f32.mxu0 0.0
    %458 = vmatmul.mubr.f32.gmra.mrb[0].mxu0 %v277
    %v459 = vpop.f32.mrb[0].mxu0
    %v460 = vadd.f32 %v132, %v459
    %v461 = vpop.f32.mrb[0].mxu0
    %v462 = vadd.f32 %v132, %v461
    %463 = vmatprep.mubr.f32.mxu0 0.0
    %464 = vmatmul.mubr.f32.gmra.mrb[0].mxu0 %v280
    %v465 = vpop.f32.mrb[0].mxu0
    %v466 = vadd.f32 %v137, %v465
    %v467 = vpop.f32.mrb[0].mxu0
    %v468 = vadd.f32 %v137, %v467
    %469 = vmatprep.mubr.f32.mxu0 0.0
    %470 = vmatmul.mubr.f32.gmra.mrb[0].mxu0 %v283
    %v471 = vpop.f32.mrb[0].mxu0
    %v472 = vadd.f32 %v142, %v471
    %v473 = vpop.f32.mrb[0].mxu0
    %v474 = vadd.f32 %v142, %v473
    %475 = vmatprep.mubr.f32.mxu0 0.0
    %476 = vmatmul.mubr.f32.gmra.mrb[0].mxu0 %v286
    %v477 = vpop.f32.mrb[0].mxu0
    %v478 = vadd.f32 %v147, %v477
    %v479 = vpop.f32.mrb[0].mxu0
    %v480 = vadd.f32 %v147, %v479
    %481 = vmatprep.mubr.f32.mxu0 0.0
    %482 = vmatmul.mubr.f32.gmra.mrb[0].mxu0 %v289
    %v483 = vpop.f32.mrb[0].mxu0
    %v484 = vadd.f32 %v152, %v483
    %v485 = vpop.f32.mrb[0].mxu0
    %v486 = vadd.f32 %v152, %v485
    %487 = vmatprep.mubr.f32.mxu0 0.0
    %488 = vmatmul.mubr.f32.gmra.mrb[0].mxu0 %v292
    %v489 = vpop.f32.mrb[0].mxu0
    %v490 = vadd.f32 %v157, %v489
    %v491 = vpop.f32.mrb[0].mxu0
    %v492 = vadd.f32 %v157, %v491
    %493 = vmatprep.mubr.f32.mxu0 0.0
    %494 = vmatmul.mubr.f32.gmra.mrb[0].mxu0 %v295
    %v495 = vpop.f32.mrb[0].mxu0
    %v496 = vadd.f32 %v162, %v495
    %v497 = vpop.f32.mrb[0].mxu0
    %v498 = vadd.f32 %v162, %v497
    %499 = vmatprep.mubr.f32.mxu0 0.0
    %500 = vmatmul.mubr.f32.gmra.mrb[0].mxu0 %v298
    %v501 = vpop.f32.mrb[0].mxu0
    %v502 = vadd.f32 %v167, %v501
    %v503 = vpop.f32.mrb[0].mxu0
    %v504 = vadd.f32 %v167, %v503
    %505 = vmatprep.mubr.f32.mxu0 0.0
    %506 = vmatmul.mubr.f32.gmra.mrb[0].mxu0 %v301
    %v507 = vpop.f32.mrb[0].mxu0
    %v508 = vadd.f32 %v172, %v507
    %v509 = vpop.f32.mrb[0].mxu0
    %v510 = vadd.f32 %v172, %v509
    %511 = vmatprep.mubr.f32.mxu0 0.0
    %512 = vmatmul.mubr.f32.gmra.mrb[0].mxu0 %v304
    %v513 = vpop.f32.mrb[0].mxu0
    %v514 = vadd.f32 %v177, %v513
    %v515 = vpop.f32.mrb[0].mxu0
    %v516 = vadd.f32 %v177, %v515
    %517 = vmatprep.mubr.f32.mxu0 0.0
    %518 = vmatmul.mubr.f32.gmra.mrb[0].mxu0 %v307
    %v519 = vpop.f32.mrb[0].mxu0
    %v520 = vadd.f32 %v182, %v519
    %v521 = vpop.f32.mrb[0].mxu0
    %v522 = vadd.f32 %v182, %v521
    %523 = vmatprep.mubr.f32.mxu0 0.0
    %524 = vmatmul.mubr.f32.gmra.mrb[0].mxu0 %v310
    %v525 = vpop.f32.mrb[0].mxu0
    %v526 = vadd.f32 %v187, %v525
    %v527 = vpop.f32.mrb[0].mxu0
    %v528 = vadd.f32 %v187, %v527
    %529 = vmatprep.mubr.f32.mxu0 0.0
    %530 = vmatmul.mubr.f32.gmra.mrb[0].mxu0 %v313
    %v531 = vpop.f32.mrb[0].mxu0
    %v532 = vadd.f32 %v192, %v531
    %v533 = vpop.f32.mrb[0].mxu0
    %v534 = vadd.f32 %v192, %v533
    %535 = vmatprep.mubr.f32.mxu0 0.0
    %536 = vmatmul.mubr.f32.gmra.mrb[0].mxu0 %v316
    %v537 = vpop.f32.mrb[0].mxu0
    %v538 = vadd.f32 %v197, %v537
    %v539 = vpop.f32.mrb[0].mxu0
    %v540 = vadd.f32 %v197, %v539
    %541 = vmatprep.mubr.f32.mxu0 0.0
    %542 = vmatmul.mubr.f32.gmra.mrb[0].mxu0 %v319
    %v543 = vpop.f32.mrb[0].mxu0
    %v544 = vadd.f32 %v202, %v543
    %v545 = vpop.f32.mrb[0].mxu0
    %v546 = vadd.f32 %v202, %v545
    %547 = vmatprep.mubr.f32.mxu0 0.0
    %548 = vmatmul.mubr.f32.gmra.mrb[0].mxu0 %v322
    %v549 = vpop.f32.mrb[0].mxu0
    %v550 = vadd.f32 %v207, %v549
    %v551 = vpop.f32.mrb[0].mxu0
    %v552 = vadd.f32 %v207, %v551
    %553 = vmatprep.mubr.f32.mxu0 0.0
    %554 = vmatmul.mubr.f32.gmra.mrb[0].mxu0 %v325
    %v555 = vpop.f32.mrb[0].mxu0
    %v556 = vadd.f32 %v212, %v555
    %v557 = vpop.f32.mrb[0].mxu0
    %v558 = vadd.f32 %v212, %v557
    %559 = vmatprep.mubr.f32.mxu0 0.0
    %560 = vmatmul.mubr.f32.gmra.mrb[0].mxu0 %v328
    %v561 = vpop.f32.mrb[0].mxu0
    %v562 = vadd.f32 %v217, %v561
    %v563 = vpop.f32.mrb[0].mxu0
    %v564 = vadd.f32 %v217, %v563
    %565 = vmatprep.mubr.f32.mxu0 0.0
    %566 = vmatmul.mubr.f32.gmra.mrb[0].mxu0 %v331
    %v567 = vpop.f32.mrb[0].mxu0
    %v568 = vadd.f32 %v222, %v567
    %v569 = vpop.f32.mrb[0].mxu0
    %v570 = vadd.f32 %v222, %v569
    %571 = vmatprep.mubr.f32.mxu0 0.0
    %572 = vmatmul.mubr.f32.gmra.mrb[0].mxu0 %v334
    %v573 = vpop.f32.mrb[0].mxu0
    %v574 = vadd.f32 %v227, %v573
    %v575 = vpop.f32.mrb[0].mxu0
    %v576 = vadd.f32 %v227, %v575
    %577 = vmatprep.mubr.f32.mxu0 0.0
    %578 = vmatmul.mubr.f32.gmra.mrb[0].mxu0 %v337
    %v579 = vpop.f32.mrb[0].mxu0
    %v580 = vadd.f32 %v232, %v579
    %v581 = vpop.f32.mrb[0].mxu0
    %v582 = vadd.f32 %v232, %v581
    %583 = vmatprep.mubr.f32.mxu0 0.0
    %584 = vmatmul.mubr.f32.gmra.mrb[0].mxu0 %v340
    %v585 = vpop.f32.mrb[0].mxu0
    %v586 = vadd.f32 %v237, %v585
    %v587 = vpop.f32.mrb[0].mxu0
    %v588 = vadd.f32 %v237, %v587
    %589 = vmatprep.mubr.f32.mxu0 0.0
    %590 = vmatmul.mubr.f32.gmra.mrb[0].mxu0 %v343
    %v591 = vpop.f32.mrb[0].mxu0
    %v592 = vadd.f32 %v242, %v591
    %v593 = vpop.f32.mrb[0].mxu0
    %v594 = vadd.f32 %v242, %v593
    %595 = vmatprep.mubr.f32.mxu0 0.0
    %596 = vmatmul.mubr.f32.gmra.mrb[0].mxu0 %v346
    %v597 = vpop.f32.mrb[0].mxu0
    %v598 = vadd.f32 %v247, %v597
    %v599 = vpop.f32.mrb[0].mxu0
    %v600 = vadd.f32 %v247, %v599
    %601 = vmatprep.mubr.f32.mxu0 0.0
    %602 = vmatmul.mubr.f32.gmra.mrb[0].mxu0 %v349
    %v603 = vpop.f32.mrb[0].mxu0
    %v604 = vadd.f32 %v252, %v603
    %v605 = vpop.f32.mrb[0].mxu0
    %v606 = vadd.f32 %v252, %v605
    %607 = vdwg.mxu0
    %v608 = vmax.f32 %v418, 0.0
    %v609 = vmax.f32 %v420, 0.0
    %v610 = vmax.f32 %v424, 0.0
    %v611 = vmax.f32 %v426, 0.0
    %v612 = vmax.f32 %v430, 0.0
    %v613 = vmax.f32 %v432, 0.0
    %v614 = vmax.f32 %v436, 0.0
    %v615 = vmax.f32 %v438, 0.0
    %v616 = vmax.f32 %v442, 0.0
    %v617 = vmax.f32 %v444, 0.0
    %v618 = vmax.f32 %v448, 0.0
    %v619 = vmax.f32 %v450, 0.0
    %v620 = vmax.f32 %v454, 0.0
    %v621 = vmax.f32 %v456, 0.0
    %v622 = vmax.f32 %v460, 0.0
    %v623 = vmax.f32 %v462, 0.0
    %v624 = vmax.f32 %v466, 0.0
    %v625 = vmax.f32 %v468, 0.0
    %v626 = vmax.f32 %v472, 0.0
    %v627 = vmax.f32 %v474, 0.0
    %v628 = vmax.f32 %v478, 0.0
    %v629 = vmax.f32 %v480, 0.0
    %v630 = vmax.f32 %v484, 0.0
    %v631 = vmax.f32 %v486, 0.0
    %v632 = vmax.f32 %v490, 0.0
    %v633 = vmax.f32 %v492, 0.0
    %v634 = vmax.f32 %v496, 0.0
    %v635 = vmax.f32 %v498, 0.0
    %v636 = vmax.f32 %v502, 0.0
    %v637 = vmax.f32 %v504, 0.0
    %v638 = vmax.f32 %v508, 0.0
    %v639 = vmax.f32 %v510, 0.0
    %v640 = vmax.f32 %v514, 0.0
    %v641 = vmax.f32 %v516, 0.0
    %v642 = vmax.f32 %v520, 0.0
    %v643 = vmax.f32 %v522, 0.0
    %v644 = vmax.f32 %v526, 0.0
    %v645 = vmax.f32 %v528, 0.0
    %v646 = vmax.f32 %v532, 0.0
    %v647 = vmax.f32 %v534, 0.0
    %v648 = vmax.f32 %v538, 0.0
    %v649 = vmax.f32 %v540, 0.0
    %v650 = vmax.f32 %v544, 0.0
    %v651 = vmax.f32 %v546, 0.0
    %v652 = vmax.f32 %v550, 0.0
    %v653 = vmax.f32 %v552, 0.0
    %v654 = vmax.f32 %v556, 0.0
    %v655 = vmax.f32 %v558, 0.0
    %v656 = vmax.f32 %v562, 0.0
    %v657 = vmax.f32 %v564, 0.0
    %v658 = vmax.f32 %v568, 0.0
    %v659 = vmax.f32 %v570, 0.0
    %v660 = vmax.f32 %v574, 0.0
    %v661 = vmax.f32 %v576, 0.0
    %v662 = vmax.f32 %v580, 0.0
    %v663 = vmax.f32 %v582, 0.0
    %v664 = vmax.f32 %v586, 0.0
    %v665 = vmax.f32 %v588, 0.0
    %v666 = vmax.f32 %v592, 0.0
    %v667 = vmax.f32 %v594, 0.0
    %v668 = vmax.f32 %v598, 0.0
    %v669 = vmax.f32 %v600, 0.0
    %v670 = vmax.f32 %v604, 0.0
    %v671 = vmax.f32 %v606, 0.0
    %v672 = vld [vmem:[%s3] sm:$0xff]
    %v673 = vld [vmem:[%s3 + $0x8] sm:$0xff]
    %v674 = vld [vmem:[%s3 + $0x10] sm:$0xff]
    %v675 = vld [vmem:[%s3 + $0x18] sm:$0xff]
    %v676 = vld [vmem:[%s3 + $0x20] sm:$0xff]
    %v677 = vld [vmem:[%s3 + $0x28] sm:$0xff]
    %v678 = vld [vmem:[%s3 + $0x30] sm:$0xff]
    %v679 = vld [vmem:[%s3 + $0x38] sm:$0xff]
    %v680 = vld [vmem:[%s3 + $0x40] sm:$0xff]
    %v681 = vld [vmem:[%s3 + $0x48] sm:$0xff]
    %v682 = vld [vmem:[%s3 + $0x50] sm:$0xff]
    %v683 = vld [vmem:[%s3 + $0x58] sm:$0xff]
    %v684 = vld [vmem:[%s3 + $0x60] sm:$0xff]
    %v685 = vld [vmem:[%s3 + $0x68] sm:$0xff]
    %v686 = vld [vmem:[%s3 + $0x70] sm:$0xff]
    %v687 = vld [vmem:[%s3 + $0x78] sm:$0xff]
    %v688 = vld [vmem:[%s3 + $0x80] sm:$0xff]
    %v689 = vld [vmem:[%s3 + $0x88] sm:$0xff]
    %v690 = vld [vmem:[%s3 + $0x90] sm:$0xff]
    %v691 = vld [vmem:[%s3 + $0x98] sm:$0xff]
    %v692 = vld [vmem:[%s3 + $0xa0] sm:$0xff]
    %v693 = vld [vmem:[%s3 + $0xa8] sm:$0xff]
    %v694 = vld [vmem:[%s3 + $0xb0] sm:$0xff]
    %v695 = vld [vmem:[%s3 + $0xb8] sm:$0xff]
    %v696 = vld [vmem:[%s3 + $0xc0] sm:$0xff]
    %v697 = vld [vmem:[%s3 + $0xc8] sm:$0xff]
    %v698 = vld [vmem:[%s3 + $0xd0] sm:$0xff]
    %v699 = vld [vmem:[%s3 + $0xd8] sm:$0xff]
    %v700 = vld [vmem:[%s3 + $0xe0] sm:$0xff]
    %v701 = vld [vmem:[%s3 + $0xe8] sm:$0xff]
    %v702 = vld [vmem:[%s3 + $0xf0] sm:$0xff]
    %v703 = vld [vmem:[%s3 + $0xf8] sm:$0xff]
    %v704 = vpack.c.bf16 %v610, %v608
    %v705 = vpack.c.bf16 %v611, %v609
    %v706 = vpack.c.bf16 %v614, %v612
    %v707 = vpack.c.bf16 %v615, %v613
    %v708 = vpack.c.bf16 %v618, %v616
    %v709 = vpack.c.bf16 %v619, %v617
    %v710 = vpack.c.bf16 %v622, %v620
    %v711 = vpack.c.bf16 %v623, %v621
    %v712 = vpack.c.bf16 %v626, %v624
    %v713 = vpack.c.bf16 %v627, %v625
    %v714 = vpack.c.bf16 %v630, %v628
    %v715 = vpack.c.bf16 %v631, %v629
    %v716 = vpack.c.bf16 %v634, %v632
    %v717 = vpack.c.bf16 %v635, %v633
    %v718 = vpack.c.bf16 %v638, %v636
    %v719 = vpack.c.bf16 %v639, %v637
    %v720 = vpack.c.bf16 %v642, %v640
    %v721 = vpack.c.bf16 %v643, %v641
    %v722 = vpack.c.bf16 %v646, %v644
    %v723 = vpack.c.bf16 %v647, %v645
    %v724 = vpack.c.bf16 %v650, %v648
    %v725 = vpack.c.bf16 %v651, %v649
    %v726 = vpack.c.bf16 %v654, %v652
    %v727 = vpack.c.bf16 %v655, %v653
    %v728 = vpack.c.bf16 %v658, %v656
    %v729 = vpack.c.bf16 %v659, %v657
    %v730 = vpack.c.bf16 %v662, %v660
    %v731 = vpack.c.bf16 %v663, %v661
    %v732 = vpack.c.bf16 %v666, %v664
    %v733 = vpack.c.bf16 %v667, %v665
    %v734 = vpack.c.bf16 %v670, %v668
    %v735 = vpack.c.bf16 %v671, %v669
    %v736 = vld [vmem:[%s4] sm:$0xff]
    %v737 = vld [vmem:[%s4 + $0x8] sm:$0xff]
    %v738 = vld [vmem:[%s4 + $0x10] sm:$0xff]
    %v739 = vld [vmem:[%s4 + $0x18] sm:$0xff]
    %v740 = vld [vmem:[%s4 + $0x20] sm:$0xff]
    %v741 = vld [vmem:[%s4 + $0x28] sm:$0xff]
    %v742 = vld [vmem:[%s4 + $0x30] sm:$0xff]
    %v743 = vld [vmem:[%s4 + $0x38] sm:$0xff]
    %v744 = vld [vmem:[%s4 + $0x40] sm:$0xff]
    %v745 = vld [vmem:[%s4 + $0x48] sm:$0xff]
    %v746 = vld [vmem:[%s4 + $0x50] sm:$0xff]
    %v747 = vld [vmem:[%s4 + $0x58] sm:$0xff]
    %v748 = vld [vmem:[%s4 + $0x60] sm:$0xff]
    %v749 = vld [vmem:[%s4 + $0x68] sm:$0xff]
    %v750 = vld [vmem:[%s4 + $0x70] sm:$0xff]
    %v751 = vld [vmem:[%s4 + $0x78] sm:$0xff]
    %v752 = vld [vmem:[%s4 + $0x80] sm:$0xff]
    %v753 = vld [vmem:[%s4 + $0x88] sm:$0xff]
    %v754 = vld [vmem:[%s4 + $0x90] sm:$0xff]
    %v755 = vld [vmem:[%s4 + $0x98] sm:$0xff]
    %v756 = vld [vmem:[%s4 + $0xa0] sm:$0xff]
    %v757 = vld [vmem:[%s4 + $0xa8] sm:$0xff]
    %v758 = vld [vmem:[%s4 + $0xb0] sm:$0xff]
    %v759 = vld [vmem:[%s4 + $0xb8] sm:$0xff]
    %v760 = vld [vmem:[%s4 + $0xc0] sm:$0xff]
    %v761 = vld [vmem:[%s4 + $0xc8] sm:$0xff]
    %v762 = vld [vmem:[%s4 + $0xd0] sm:$0xff]
    %v763 = vld [vmem:[%s4 + $0xd8] sm:$0xff]
    %v764 = vld [vmem:[%s4 + $0xe0] sm:$0xff]
    %v765 = vld [vmem:[%s4 + $0xe8] sm:$0xff]
    %v766 = vld [vmem:[%s4 + $0xf0] sm:$0xff]
    %v767 = vld [vmem:[%s4 + $0xf8] sm:$0xff]
    %769 = vset.pattern.permute.xlu0 0
    %770 = vperm.xlu0 %769, %v736
    %v771 = vpop.permute.xlu0 %770
    %774 = vset.pattern.permute.xlu0 0
    %775 = vperm.xlu0 %774, %v737
    %v776 = vpop.permute.xlu0 %775
    %779 = vset.pattern.permute.xlu0 0
    %780 = vperm.xlu0 %779, %v738
    %v781 = vpop.permute.xlu0 %780
    %784 = vset.pattern.permute.xlu0 0
    %785 = vperm.xlu0 %784, %v739
    %v786 = vpop.permute.xlu0 %785
    %789 = vset.pattern.permute.xlu0 0
    %790 = vperm.xlu0 %789, %v740
    %v791 = vpop.permute.xlu0 %790
    %794 = vset.pattern.permute.xlu0 0
    %795 = vperm.xlu0 %794, %v741
    %v796 = vpop.permute.xlu0 %795
    %799 = vset.pattern.permute.xlu0 0
    %800 = vperm.xlu0 %799, %v742
    %v801 = vpop.permute.xlu0 %800
    %804 = vset.pattern.permute.xlu0 0
    %805 = vperm.xlu0 %804, %v743
    %v806 = vpop.permute.xlu0 %805
    %809 = vset.pattern.permute.xlu0 0
    %810 = vperm.xlu0 %809, %v744
    %v811 = vpop.permute.xlu0 %810
    %814 = vset.pattern.permute.xlu0 0
    %815 = vperm.xlu0 %814, %v745
    %v816 = vpop.permute.xlu0 %815
    %819 = vset.pattern.permute.xlu0 0
    %820 = vperm.xlu0 %819, %v746
    %v821 = vpop.permute.xlu0 %820
    %824 = vset.pattern.permute.xlu0 0
    %825 = vperm.xlu0 %824, %v747
    %v826 = vpop.permute.xlu0 %825
    %829 = vset.pattern.permute.xlu0 0
    %830 = vperm.xlu0 %829, %v748
    %v831 = vpop.permute.xlu0 %830
    %834 = vset.pattern.permute.xlu0 0
    %835 = vperm.xlu0 %834, %v749
    %v836 = vpop.permute.xlu0 %835
    %839 = vset.pattern.permute.xlu0 0
    %840 = vperm.xlu0 %839, %v750
    %v841 = vpop.permute.xlu0 %840
    %844 = vset.pattern.permute.xlu0 0
    %845 = vperm.xlu0 %844, %v751
    %v846 = vpop.permute.xlu0 %845
    %849 = vset.pattern.permute.xlu0 0
    %850 = vperm.xlu0 %849, %v752
    %v851 = vpop.permute.xlu0 %850
    %854 = vset.pattern.permute.xlu0 0
    %855 = vperm.xlu0 %854, %v753
    %v856 = vpop.permute.xlu0 %855
    %859 = vset.pattern.permute.xlu0 0
    %860 = vperm.xlu0 %859, %v754
    %v861 = vpop.permute.xlu0 %860
    %864 = vset.pattern.permute.xlu0 0
    %865 = vperm.xlu0 %864, %v755
    %v866 = vpop.permute.xlu0 %865
    %869 = vset.pattern.permute.xlu0 0
    %870 = vperm.xlu0 %869, %v756
    %v871 = vpop.permute.xlu0 %870
    %874 = vset.pattern.permute.xlu0 0
    %875 = vperm.xlu0 %874, %v757
    %v876 = vpop.permute.xlu0 %875
    %879 = vset.pattern.permute.xlu0 0
    %880 = vperm.xlu0 %879, %v758
    %v881 = vpop.permute.xlu0 %880
    %884 = vset.pattern.permute.xlu0 0
    %885 = vperm.xlu0 %884, %v759
    %v886 = vpop.permute.xlu0 %885
    %889 = vset.pattern.permute.xlu0 0
    %890 = vperm.xlu0 %889, %v760
    %v891 = vpop.permute.xlu0 %890
    %894 = vset.pattern.permute.xlu0 0
    %895 = vperm.xlu0 %894, %v761
    %v896 = vpop.permute.xlu0 %895
    %899 = vset.pattern.permute.xlu0 0
    %900 = vperm.xlu0 %899, %v762
    %v901 = vpop.permute.xlu0 %900
    %904 = vset.pattern.permute.xlu0 0
    %905 = vperm.xlu0 %904, %v763
    %v906 = vpop.permute.xlu0 %905
    %909 = vset.pattern.permute.xlu0 0
    %910 = vperm.xlu0 %909, %v764
    %v911 = vpop.permute.xlu0 %910
    %914 = vset.pattern.permute.xlu0 0
    %915 = vperm.xlu0 %914, %v765
    %v916 = vpop.permute.xlu0 %915
    %919 = vset.pattern.permute.xlu0 0
    %920 = vperm.xlu0 %919, %v766
    %v921 = vpop.permute.xlu0 %920
    %924 = vset.pattern.permute.xlu0 0
    %925 = vperm.xlu0 %924, %v767
    %v926 = vpop.permute.xlu0 %925
    %v960 = vunpack.c.l.b16 %v672
    %v961 = vunpack.c.h.b16 %v672
    %v962 = vunpack.c.l.b16 %v673
    %v963 = vunpack.c.h.b16 %v673
    %v964 = vunpack.c.l.b16 %v674
    %v965 = vunpack.c.h.b16 %v674
    %v966 = vunpack.c.l.b16 %v675
    %v967 = vunpack.c.h.b16 %v675
    %v968 = vunpack.c.l.b16 %v676
    %v969 = vunpack.c.h.b16 %v676
    %v970 = vunpack.c.l.b16 %v677
    %v971 = vunpack.c.h.b16 %v677
    %v972 = vunpack.c.l.b16 %v678
    %v973 = vunpack.c.h.b16 %v678
    %v974 = vunpack.c.l.b16 %v679
    %v975 = vunpack.c.h.b16 %v679
    %v976 = vunpack.c.l.b16 %v680
    %v977 = vunpack.c.h.b16 %v680
    %v978 = vunpack.c.l.b16 %v681
    %v979 = vunpack.c.h.b16 %v681
    %v980 = vunpack.c.l.b16 %v682
    %v981 = vunpack.c.h.b16 %v682
    %v982 = vunpack.c.l.b16 %v683
    %v983 = vunpack.c.h.b16 %v683
    %v984 = vunpack.c.l.b16 %v684
    %v985 = vunpack.c.h.b16 %v684
    %v986 = vunpack.c.l.b16 %v685
    %v987 = vunpack.c.h.b16 %v685
    %v988 = vunpack.c.l.b16 %v686
    %v989 = vunpack.c.h.b16 %v686
    %v990 = vunpack.c.l.b16 %v687
    %v991 = vunpack.c.h.b16 %v687
    %v992 = vunpack.c.l.b16 %v688
    %v993 = vunpack.c.h.b16 %v688
    %v994 = vunpack.c.l.b16 %v689
    %v995 = vunpack.c.h.b16 %v689
    %v996 = vunpack.c.l.b16 %v690
    %v997 = vunpack.c.h.b16 %v690
    %v998 = vunpack.c.l.b16 %v691
    %v999 = vunpack.c.h.b16 %v691
    %v1000 = vunpack.c.l.b16 %v692
    %v1001 = vunpack.c.h.b16 %v692
    %v1002 = vunpack.c.l.b16 %v693
    %v1003 = vunpack.c.h.b16 %v693
    %v1004 = vunpack.c.l.b16 %v694
    %v1005 = vunpack.c.h.b16 %v694
    %v1006 = vunpack.c.l.b16 %v695
    %v1007 = vunpack.c.h.b16 %v695
    %v1008 = vunpack.c.l.b16 %v696
    %v1009 = vunpack.c.h.b16 %v696
    %v1010 = vunpack.c.l.b16 %v697
    %v1011 = vunpack.c.h.b16 %v697
    %v1012 = vunpack.c.l.b16 %v698
    %v1013 = vunpack.c.h.b16 %v698
    %v1014 = vunpack.c.l.b16 %v699
    %v1015 = vunpack.c.h.b16 %v699
    %v1016 = vunpack.c.l.b16 %v700
    %v1017 = vunpack.c.h.b16 %v700
    %v1018 = vunpack.c.l.b16 %v701
    %v1019 = vunpack.c.h.b16 %v701
    %v1020 = vunpack.c.l.b16 %v702
    %v1021 = vunpack.c.h.b16 %v702
    %v1022 = vunpack.c.l.b16 %v703
    %v1023 = vunpack.c.h.b16 %v703
    %v1024 = vpack.c.b16 %v962, %v960
    %v1025 = vpack.c.b16 %v963, %v961
    %v1026 = vpack.c.b16 %v966, %v964
    %v1027 = vpack.c.b16 %v967, %v965
    %v1028 = vpack.c.b16 %v970, %v968
    %v1029 = vpack.c.b16 %v971, %v969
    %v1030 = vpack.c.b16 %v974, %v972
    %v1031 = vpack.c.b16 %v975, %v973
    %v1032 = vpack.c.b16 %v978, %v976
    %v1033 = vpack.c.b16 %v979, %v977
    %v1034 = vpack.c.b16 %v982, %v980
    %v1035 = vpack.c.b16 %v983, %v981
    %v1036 = vpack.c.b16 %v986, %v984
    %v1037 = vpack.c.b16 %v987, %v985
    %v1038 = vpack.c.b16 %v990, %v988
    %v1039 = vpack.c.b16 %v991, %v989
    %v1040 = vpack.c.b16 %v994, %v992
    %v1041 = vpack.c.b16 %v995, %v993
    %v1042 = vpack.c.b16 %v998, %v996
    %v1043 = vpack.c.b16 %v999, %v997
    %v1044 = vpack.c.b16 %v1002, %v1000
    %v1045 = vpack.c.b16 %v1003, %v1001
    %v1046 = vpack.c.b16 %v1006, %v1004
    %v1047 = vpack.c.b16 %v1007, %v1005
    %v1048 = vpack.c.b16 %v1010, %v1008
    %v1049 = vpack.c.b16 %v1011, %v1009
    %v1050 = vpack.c.b16 %v1014, %v1012
    %v1051 = vpack.c.b16 %v1015, %v1013
    %v1052 = vpack.c.b16 %v1018, %v1016
    %v1053 = vpack.c.b16 %v1019, %v1017
    %v1054 = vpack.c.b16 %v1022, %v1020
    %v1055 = vpack.c.b16 %v1023, %v1021
    %1088 = vmatprep.subr.bf16.mxu0 %v705
    %1089 = vmatpush1.bf16.msra.mxu0 %v704
    %1090 = vmatprep.subr.bf16.mxu0 %v707
    %1091 = vmatpush1.bf16.msra.mxu0 %v706
    %1092 = vmatprep.subr.bf16.mxu0 %v709
    %1093 = vmatpush1.bf16.msra.mxu0 %v708
    %1094 = vmatprep.subr.bf16.mxu0 %v711
    %1095 = vmatpush1.bf16.msra.mxu0 %v710
    %1096 = vmatprep.subr.bf16.mxu0 %v713
    %1097 = vmatpush1.bf16.msra.mxu0 %v712
    %1098 = vmatprep.subr.bf16.mxu0 %v715
    %1099 = vmatpush1.bf16.msra.mxu0 %v714
    %1100 = vmatprep.subr.bf16.mxu0 %v717
    %1101 = vmatpush1.bf16.msra.mxu0 %v716
    %1102 = vmatprep.subr.bf16.mxu0 %v719
    %1103 = vmatpush1.bf16.msra.mxu0 %v718
    %1104 = vmatprep.subr.bf16.mxu0 %v721
    %1105 = vmatpush1.bf16.msra.mxu0 %v720
    %1106 = vmatprep.subr.bf16.mxu0 %v723
    %1107 = vmatpush1.bf16.msra.mxu0 %v722
    %1108 = vmatprep.subr.bf16.mxu0 %v725
    %1109 = vmatpush1.bf16.msra.mxu0 %v724
    %1110 = vmatprep.subr.bf16.mxu0 %v727
    %1111 = vmatpush1.bf16.msra.mxu0 %v726
    %1112 = vmatprep.subr.bf16.mxu0 %v729
    %1113 = vmatpush1.bf16.msra.mxu0 %v728
    %1114 = vmatprep.subr.bf16.mxu0 %v731
    %1115 = vmatpush1.bf16.msra.mxu0 %v730
    %1116 = vmatprep.subr.bf16.mxu0 %v733
    %1117 = vmatpush1.bf16.msra.mxu0 %v732
    %1118 = vmatprep.subr.bf16.mxu0 %v735
    %1119 = vmatpush1.bf16.msra.mxu0 %v734
    %1120 = vmatprep.mubr.bf16.mxu0 %v1025
    %1121 = vmatmul.mubr.bf16.gmra.mrb[0].mxu0 %v1024
    %v1122 = vpop.f32.mrb[0].mxu0
    %v1123 = vadd.f32 %v771, %v1122
    %v1124 = vpop.f32.mrb[0].mxu0
    %v1125 = vadd.f32 %v771, %v1124
    %v1126 = vpop.f32.mrb[0].mxu0
    %v1127 = vadd.f32 %v776, %v1126
    %v1128 = vpop.f32.mrb[0].mxu0
    %v1129 = vadd.f32 %v776, %v1128
    %1130 = vmatprep.mubr.bf16.mxu0 %v1027
    %1131 = vmatmul.mubr.bf16.gmra.mrb[0].mxu0 %v1026
    %v1132 = vpop.f32.mrb[0].mxu0
    %v1133 = vadd.f32 %v781, %v1132
    %v1134 = vpop.f32.mrb[0].mxu0
    %v1135 = vadd.f32 %v781, %v1134
    %v1136 = vpop.f32.mrb[0].mxu0
    %v1137 = vadd.f32 %v786, %v1136
    %v1138 = vpop.f32.mrb[0].mxu0
    %v1139 = vadd.f32 %v786, %v1138
    %1140 = vmatprep.mubr.bf16.mxu0 %v1029
    %1141 = vmatmul.mubr.bf16.gmra.mrb[0].mxu0 %v1028
    %v1142 = vpop.f32.mrb[0].mxu0
    %v1143 = vadd.f32 %v791, %v1142
    %v1144 = vpop.f32.mrb[0].mxu0
    %v1145 = vadd.f32 %v791, %v1144
    %v1146 = vpop.f32.mrb[0].mxu0
    %v1147 = vadd.f32 %v796, %v1146
    %v1148 = vpop.f32.mrb[0].mxu0
    %v1149 = vadd.f32 %v796, %v1148
    %1150 = vmatprep.mubr.bf16.mxu0 %v1031
    %1151 = vmatmul.mubr.bf16.gmra.mrb[0].mxu0 %v1030
    %v1152 = vpop.f32.mrb[0].mxu0
    %v1153 = vadd.f32 %v801, %v1152
    %v1154 = vpop.f32.mrb[0].mxu0
    %v1155 = vadd.f32 %v801, %v1154
    %v1156 = vpop.f32.mrb[0].mxu0
    %v1157 = vadd.f32 %v806, %v1156
    %v1158 = vpop.f32.mrb[0].mxu0
    %v1159 = vadd.f32 %v806, %v1158
    %1160 = vmatprep.mubr.bf16.mxu0 %v1033
    %1161 = vmatmul.mubr.bf16.gmra.mrb[0].mxu0 %v1032
    %v1162 = vpop.f32.mrb[0].mxu0
    %v1163 = vadd.f32 %v811, %v1162
    %v1164 = vpop.f32.mrb[0].mxu0
    %v1165 = vadd.f32 %v811, %v1164
    %v1166 = vpop.f32.mrb[0].mxu0
    %v1167 = vadd.f32 %v816, %v1166
    %v1168 = vpop.f32.mrb[0].mxu0
    %v1169 = vadd.f32 %v816, %v1168
    %1170 = vmatprep.mubr.bf16.mxu0 %v1035
    %1171 = vmatmul.mubr.bf16.gmra.mrb[0].mxu0 %v1034
    %v1172 = vpop.f32.mrb[0].mxu0
    %v1173 = vadd.f32 %v821, %v1172
    %v1174 = vpop.f32.mrb[0].mxu0
    %v1175 = vadd.f32 %v821, %v1174
    %v1176 = vpop.f32.mrb[0].mxu0
    %v1177 = vadd.f32 %v826, %v1176
    %v1178 = vpop.f32.mrb[0].mxu0
    %v1179 = vadd.f32 %v826, %v1178
    %1180 = vmatprep.mubr.bf16.mxu0 %v1037
    %1181 = vmatmul.mubr.bf16.gmra.mrb[0].mxu0 %v1036
    %v1182 = vpop.f32.mrb[0].mxu0
    %v1183 = vadd.f32 %v831, %v1182
    %v1184 = vpop.f32.mrb[0].mxu0
    %v1185 = vadd.f32 %v831, %v1184
    %v1186 = vpop.f32.mrb[0].mxu0
    %v1187 = vadd.f32 %v836, %v1186
    %v1188 = vpop.f32.mrb[0].mxu0
    %v1189 = vadd.f32 %v836, %v1188
    %1190 = vmatprep.mubr.bf16.mxu0 %v1039
    %1191 = vmatmul.mubr.bf16.gmra.mrb[0].mxu0 %v1038
    %v1192 = vpop.f32.mrb[0].mxu0
    %v1193 = vadd.f32 %v841, %v1192
    %v1194 = vpop.f32.mrb[0].mxu0
    %v1195 = vadd.f32 %v841, %v1194
    %v1196 = vpop.f32.mrb[0].mxu0
    %v1197 = vadd.f32 %v846, %v1196
    %v1198 = vpop.f32.mrb[0].mxu0
    %v1199 = vadd.f32 %v846, %v1198
    %1200 = vmatprep.mubr.bf16.mxu0 %v1041
    %1201 = vmatmul.mubr.bf16.gmra.mrb[0].mxu0 %v1040
    %v1202 = vpop.f32.mrb[0].mxu0
    %v1203 = vadd.f32 %v851, %v1202
    %v1204 = vpop.f32.mrb[0].mxu0
    %v1205 = vadd.f32 %v851, %v1204
    %v1206 = vpop.f32.mrb[0].mxu0
    %v1207 = vadd.f32 %v856, %v1206
    %v1208 = vpop.f32.mrb[0].mxu0
    %v1209 = vadd.f32 %v856, %v1208
    %1210 = vmatprep.mubr.bf16.mxu0 %v1043
    %1211 = vmatmul.mubr.bf16.gmra.mrb[0].mxu0 %v1042
    %v1212 = vpop.f32.mrb[0].mxu0
    %v1213 = vadd.f32 %v861, %v1212
    %v1214 = vpop.f32.mrb[0].mxu0
    %v1215 = vadd.f32 %v861, %v1214
    %v1216 = vpop.f32.mrb[0].mxu0
    %v1217 = vadd.f32 %v866, %v1216
    %v1218 = vpop.f32.mrb[0].mxu0
    %v1219 = vadd.f32 %v866, %v1218
    %1220 = vmatprep.mubr.bf16.mxu0 %v1045
    %1221 = vmatmul.mubr.bf16.gmra.mrb[0].mxu0 %v1044
    %v1222 = vpop.f32.mrb[0].mxu0
    %v1223 = vadd.f32 %v871, %v1222
    %v1224 = vpop.f32.mrb[0].mxu0
    %v1225 = vadd.f32 %v871, %v1224
    %v1226 = vpop.f32.mrb[0].mxu0
    %v1227 = vadd.f32 %v876, %v1226
    %v1228 = vpop.f32.mrb[0].mxu0
    %v1229 = vadd.f32 %v876, %v1228
    %1230 = vmatprep.mubr.bf16.mxu0 %v1047
    %1231 = vmatmul.mubr.bf16.gmra.mrb[0].mxu0 %v1046
    %v1232 = vpop.f32.mrb[0].mxu0
    %v1233 = vadd.f32 %v881, %v1232
    %v1234 = vpop.f32.mrb[0].mxu0
    %v1235 = vadd.f32 %v881, %v1234
    %v1236 = vpop.f32.mrb[0].mxu0
    %v1237 = vadd.f32 %v886, %v1236
    %v1238 = vpop.f32.mrb[0].mxu0
    %v1239 = vadd.f32 %v886, %v1238
    %1240 = vmatprep.mubr.bf16.mxu0 %v1049
    %1241 = vmatmul.mubr.bf16.gmra.mrb[0].mxu0 %v1048
    %v1242 = vpop.f32.mrb[0].mxu0
    %v1243 = vadd.f32 %v891, %v1242
    %v1244 = vpop.f32.mrb[0].mxu0
    %v1245 = vadd.f32 %v891, %v1244
    %v1246 = vpop.f32.mrb[0].mxu0
    %v1247 = vadd.f32 %v896, %v1246
    %v1248 = vpop.f32.mrb[0].mxu0
    %v1249 = vadd.f32 %v896, %v1248
    %1250 = vmatprep.mubr.bf16.mxu0 %v1051
    %1251 = vmatmul.mubr.bf16.gmra.mrb[0].mxu0 %v1050
    %v1252 = vpop.f32.mrb[0].mxu0
    %v1253 = vadd.f32 %v901, %v1252
    %v1254 = vpop.f32.mrb[0].mxu0
    %v1255 = vadd.f32 %v901, %v1254
    %v1256 = vpop.f32.mrb[0].mxu0
    %v1257 = vadd.f32 %v906, %v1256
    %v1258 = vpop.f32.mrb[0].mxu0
    %v1259 = vadd.f32 %v906, %v1258
    %1260 = vmatprep.mubr.bf16.mxu0 %v1053
    %1261 = vmatmul.mubr.bf16.gmra.mrb[0].mxu0 %v1052
    %v1262 = vpop.f32.mrb[0].mxu0
    %v1263 = vadd.f32 %v911, %v1262
    %v1264 = vpop.f32.mrb[0].mxu0
    %v1265 = vadd.f32 %v911, %v1264
    %v1266 = vpop.f32.mrb[0].mxu0
    %v1267 = vadd.f32 %v916, %v1266
    %v1268 = vpop.f32.mrb[0].mxu0
    %v1269 = vadd.f32 %v916, %v1268
    %1270 = vmatprep.mubr.bf16.mxu0 %v1055
    %1271 = vmatmul.mubr.bf16.gmra.mrb[0].mxu0 %v1054
    %v1272 = vpop.f32.mrb[0].mxu0
    %v1273 = vadd.f32 %v921, %v1272
    %v1274 = vpop.f32.mrb[0].mxu0
    %v1275 = vadd.f32 %v921, %v1274
    %v1276 = vpop.f32.mrb[0].mxu0
    %v1277 = vadd.f32 %v926, %v1276
    %v1278 = vpop.f32.mrb[0].mxu0
    %v1279 = vadd.f32 %v926, %v1278
    %1280 = vdwg.mxu0
    %v1281 = vmax.f32 %v1123, 0.0
    %v1282 = vmax.f32 %v1125, 0.0
    %v1283 = vmax.f32 %v1127, 0.0
    %v1284 = vmax.f32 %v1129, 0.0
    %v1285 = vmax.f32 %v1133, 0.0
    %v1286 = vmax.f32 %v1135, 0.0
    %v1287 = vmax.f32 %v1137, 0.0
    %v1288 = vmax.f32 %v1139, 0.0
    %v1289 = vmax.f32 %v1143, 0.0
    %v1290 = vmax.f32 %v1145, 0.0
    %v1291 = vmax.f32 %v1147, 0.0
    %v1292 = vmax.f32 %v1149, 0.0
    %v1293 = vmax.f32 %v1153, 0.0
    %v1294 = vmax.f32 %v1155, 0.0
    %v1295 = vmax.f32 %v1157, 0.0
    %v1296 = vmax.f32 %v1159, 0.0
    %v1297 = vmax.f32 %v1163, 0.0
    %v1298 = vmax.f32 %v1165, 0.0
    %v1299 = vmax.f32 %v1167, 0.0
    %v1300 = vmax.f32 %v1169, 0.0
    %v1301 = vmax.f32 %v1173, 0.0
    %v1302 = vmax.f32 %v1175, 0.0
    %v1303 = vmax.f32 %v1177, 0.0
    %v1304 = vmax.f32 %v1179, 0.0
    %v1305 = vmax.f32 %v1183, 0.0
    %v1306 = vmax.f32 %v1185, 0.0
    %v1307 = vmax.f32 %v1187, 0.0
    %v1308 = vmax.f32 %v1189, 0.0
    %v1309 = vmax.f32 %v1193, 0.0
    %v1310 = vmax.f32 %v1195, 0.0
    %v1311 = vmax.f32 %v1197, 0.0
    %v1312 = vmax.f32 %v1199, 0.0
    %v1313 = vmax.f32 %v1203, 0.0
    %v1314 = vmax.f32 %v1205, 0.0
    %v1315 = vmax.f32 %v1207, 0.0
    %v1316 = vmax.f32 %v1209, 0.0
    %v1317 = vmax.f32 %v1213, 0.0
    %v1318 = vmax.f32 %v1215, 0.0
    %v1319 = vmax.f32 %v1217, 0.0
    %v1320 = vmax.f32 %v1219, 0.0
    %v1321 = vmax.f32 %v1223, 0.0
    %v1322 = vmax.f32 %v1225, 0.0
    %v1323 = vmax.f32 %v1227, 0.0
    %v1324 = vmax.f32 %v1229, 0.0
    %v1325 = vmax.f32 %v1233, 0.0
    %v1326 = vmax.f32 %v1235, 0.0
    %v1327 = vmax.f32 %v1237, 0.0
    %v1328 = vmax.f32 %v1239, 0.0
    %v1329 = vmax.f32 %v1243, 0.0
    %v1330 = vmax.f32 %v1245, 0.0
    %v1331 = vmax.f32 %v1247, 0.0
    %v1332 = vmax.f32 %v1249, 0.0
    %v1333 = vmax.f32 %v1253, 0.0
    %v1334 = vmax.f32 %v1255, 0.0
    %v1335 = vmax.f32 %v1257, 0.0
    %v1336 = vmax.f32 %v1259, 0.0
    %v1337 = vmax.f32 %v1263, 0.0
    %v1338 = vmax.f32 %v1265, 0.0
    %v1339 = vmax.f32 %v1267, 0.0
    %v1340 = vmax.f32 %v1269, 0.0
    %v1341 = vmax.f32 %v1273, 0.0
    %v1342 = vmax.f32 %v1275, 0.0
    %v1343 = vmax.f32 %v1277, 0.0
    %v1344 = vmax.f32 %v1279, 0.0
    %v1345 = vld [vmem:[%s5] sm:$0xff]
    %v1346 = vld [vmem:[%s5 + $0x8] sm:$0xff]
    %1347 = vmatprep.subr.mxu0 %v1282
    %1348 = vmatpush1.msra.mxu0 %v1281
    %1349 = vmatprep.subr.mxu0 %v1284
    %1350 = vmatpush1.msra.mxu0 %v1283
    %1351 = vmatprep.subr.mxu0 %v1286
    %1352 = vmatpush1.msra.mxu0 %v1285
    %1353 = vmatprep.subr.mxu0 %v1288
    %1354 = vmatpush1.msra.mxu0 %v1287
    %1355 = vmatprep.subr.mxu0 %v1290
    %1356 = vmatpush1.msra.mxu0 %v1289
    %1357 = vmatprep.subr.mxu0 %v1292
    %1358 = vmatpush1.msra.mxu0 %v1291
    %1359 = vmatprep.subr.mxu0 %v1294
    %1360 = vmatpush1.msra.mxu0 %v1293
    %1361 = vmatprep.subr.mxu0 %v1296
    %1362 = vmatpush1.msra.mxu0 %v1295
    %1363 = vmatprep.subr.mxu0 %v1298
    %1364 = vmatpush1.msra.mxu0 %v1297
    %1365 = vmatprep.subr.mxu0 %v1300
    %1366 = vmatpush1.msra.mxu0 %v1299
    %1367 = vmatprep.subr.mxu0 %v1302
    %1368 = vmatpush1.msra.mxu0 %v1301
    %1369 = vmatprep.subr.mxu0 %v1304
    %1370 = vmatpush1.msra.mxu0 %v1303
    %1371 = vmatprep.subr.mxu0 %v1306
    %1372 = vmatpush1.msra.mxu0 %v1305
    %1373 = vmatprep.subr.mxu0 %v1308
    %1374 = vmatpush1.msra.mxu0 %v1307
    %1375 = vmatprep.subr.mxu0 %v1310
    %1376 = vmatpush1.msra.mxu0 %v1309
    %1377 = vmatprep.subr.mxu0 %v1312
    %1378 = vmatpush1.msra.mxu0 %v1311
    %1379 = vmatprep.subr.mxu0 %v1314
    %1380 = vmatpush1.msra.mxu0 %v1313
    %1381 = vmatprep.subr.mxu0 %v1316
    %1382 = vmatpush1.msra.mxu0 %v1315
    %1383 = vmatprep.subr.mxu0 %v1318
    %1384 = vmatpush1.msra.mxu0 %v1317
    %1385 = vmatprep.subr.mxu0 %v1320
    %1386 = vmatpush1.msra.mxu0 %v1319
    %1387 = vmatprep.subr.mxu0 %v1322
    %1388 = vmatpush1.msra.mxu0 %v1321
    %1389 = vmatprep.subr.mxu0 %v1324
    %1390 = vmatpush1.msra.mxu0 %v1323
    %1391 = vmatprep.subr.mxu0 %v1326
    %1392 = vmatpush1.msra.mxu0 %v1325
    %1393 = vmatprep.subr.mxu0 %v1328
    %1394 = vmatpush1.msra.mxu0 %v1327
    %1395 = vmatprep.subr.mxu0 %v1330
    %1396 = vmatpush1.msra.mxu0 %v1329
    %1397 = vmatprep.subr.mxu0 %v1332
    %1398 = vmatpush1.msra.mxu0 %v1331
    %1399 = vmatprep.subr.mxu0 %v1334
    %1400 = vmatpush1.msra.mxu0 %v1333
    %1401 = vmatprep.subr.mxu0 %v1336
    %1402 = vmatpush1.msra.mxu0 %v1335
    %1403 = vmatprep.subr.mxu0 %v1338
    %1404 = vmatpush1.msra.mxu0 %v1337
    %1405 = vmatprep.subr.mxu0 %v1340
    %1406 = vmatpush1.msra.mxu0 %v1339
    %1407 = vmatprep.subr.mxu0 %v1342
    %1408 = vmatpush1.msra.mxu0 %v1341
    %1409 = vmatprep.subr.mxu0 %v1344
    %1410 = vmatpush1.msra.mxu0 %v1343
    %1411 = vmatprep.mubr.f32.mxu0 %v1346
    %1412 = vmatmul.mubr.f32.gmra.mrb[0].mxu0 %v1345
    %v1413 = vpop.f32.mrb[0].mxu0
    %v1414 = vadd.f32 0.0, %v1413
    %v1415 = vpop.f32.mrb[0].mxu0
    %v1416 = vadd.f32 0.0, %v1415
    %1417 = vdwg.mxu0
    %s1418 = sld [smem:[#allocation2]]
    %v1419 = vstv %s1418
    %v1420 = vadd.f32 %v1414, %v1419
    %v1421 = vadd.f32 %v1416, %v1419
    %v1424 = vcombine.low %v1420, %v1421
    %v1426 = vunpack.c.l.s4 1966171168
    %v1427 = vunpack.c.0.s8 %v1426
    %v1428 = vlaneseq
    %v1429 = vshrl.u32 %v1428, 7
    %v1430 = vsub.s32 %v1427, %v1429
    %v1431 = vrot.slane %v1424, %v1430
    %v1433 = vunpack.c.l.s4 1966171168
    %v1434 = vunpack.c.0.s8 %v1433
    %v1435 = vlaneseq
    %v1436 = vshrl.u32 %v1435, 7
    %v1437 = vsub.s32 %v1434, %v1436
    %v1438 = vrot.slane %v1431, %v1437
    %v1440 = vlaneseq
    %vm1441 = vcmp.ge.s32.totalorder %v1440, 0
    %vm1442 = vcmp.lt.s32.totalorder %v1440, 256
    %vm1443 = vmand %vm1441, %vm1442
    %1444 = vst.msk [vmem:[#allocation3] sm:$0x3] %vm1443, %v1438
    // Predicated region
    $region30: #{tpu_custom_call.1} parent=1 // pred_check
      _
    $region31: #{tpu_custom_call.1} parent=1 // pred_check_branch
      %1446 = sbr.rel (0) target = $region33
    $region32: #{tpu_custom_call.1} parent=1 // pred_region
      %s1448 = ssub.s32 32, 32
      %1449 = vsyncadd [#allocation4], %s1448
      %s1451 = sshll.u32 [#allocation3], 4
      %s1452 = int_to_ptr.vmem [resolvable:$true] %s1451
      %1454 = dma.vmem_to_hbm [thread:$0]  %s1452, 32, %s7, [#allocation4]
    $region33: #{tpu_custom_call.1} parent=1 // pred_fallthru
      _
    // Predicated region
    $region34: #{tpu_custom_call.1} parent=1 // pred_check
      _
    $region35: #{tpu_custom_call.1} parent=1 // pred_check_branch
      %1456 = sbr.rel (0) target = $region37
    $region36: #{tpu_custom_call.1} parent=1 // pred_region
      %1457 = dma.done [#allocation4], 32
    $region37: #{tpu_custom_call.1} parent=1 // pred_fallthru
      _
    %1458 = vsyncpa [#allocation4], 1

</llo_original>
